<compile_context>
chip_gen: v7x
topology: tpu7x:2x2x1
jax: 0.10.0
libtpu: 0.0.40
codegen_flags: <defaults>
</compile_context>

<pallas_src>
import functools

import jax
import jax.numpy as jnp
from jax.experimental import pallas as pl
from jax.experimental.pallas import tpu as pltpu

# Constants from src/compression/entropy_models.py (HiFiC)
MIN_LIKELIHOOD = 1e-9
MAX_LIKELIHOOD = 1e4   # never binds: the Gaussian-box likelihood is <= 1 (kept for parity)
MIN_SCALE = 0.11

_INV_SQRT2 = 0.7071067811865476


def _prior_density_kernel(x_ref, mean_ref, scale_ref, out_ref, *,
                          min_likelihood, scale_lower_bound):
    x = x_ref[...].astype(jnp.float32)
    mean = mean_ref[...].astype(jnp.float32)
    scale = scale_ref[...].astype(jnp.float32)

    # Fused upstream lower_bound_toward(scale, MIN_SCALE) clamp (forward = max).
    # NOTE: with scale_lower_bound=None, `scale` must be strictly positive.
    if scale_lower_bound is not None:
        scale = jnp.maximum(scale, scale_lower_bound)

    xa = jnp.abs(x - mean)

    # Exact f32 reciprocal (approx+Newton previously exceeded the 1e-6 tolerance).
    c = _INV_SQRT2 / scale
    u = (0.5 - xa) * c
    v = (0.5 + xa) * c

    # Phi(u) - Phi(-v) == 0.5 * (erf(u) + erf(v))  (erf odd; constants cancel).
    likelihood = 0.5 * (jax.lax.erf(u) + jax.lax.erf(v))

    out_ref[...] = jnp.maximum(likelihood, min_likelihood).astype(out_ref.dtype)


def _round_up(a, m):
    return ((a + m - 1) // m) * m


def _num_tensorcores():
    """Best-effort TensorCores per chip (v7x = 2, v5e/v6e = 1). Safe fallback = 1."""
    try:
        kind = jax.devices()[0].device_kind.lower()
    except Exception:
        return 1
    return 2 if ("v7" in kind or "7x" in kind) else 1


def _choose_layout(n, row_align):
    """Pick a lane-dense (cols, pad) so x.reshape(rows, cols) is zero-copy when possible.

    Prefers the widest cols (multiple of 128) dividing n whose row count is
    row_align-aligned; otherwise any dividing cols (full-dim blocks handle the
    unaligned row count); padding only when n is not a multiple of 128.
    """
    best = None
    for c in range(1024, 0, -128):
        if n % c == 0:
            if best is None:
                best = c
            if (n // c) % row_align == 0:
                return c, 0
    if best is not None:
        return best, 0
    cols = 128
    pad = _round_up(n, row_align * cols) - n
    return cols, pad


def prior_density_forward(x, mean, scale, *,
                          min_likelihood=MIN_LIKELIHOOD,
                          scale_lower_bound=MIN_SCALE):
    """PriorDensity.forward: likelihood of x under N(mean, scale) convolved with U(-1/2, 1/2).

    Elementwise over any shape (NCHW in HiFiC). `scale_lower_bound` fuses the
    upstream lower_bound_toward(scale, MIN_SCALE) clamp; pass None only if scale
    is already strictly positive (the kernel divides by it). MAX_LIKELIHOOD is
    never applied because the likelihood is bounded by 1.
    """
    assert x.shape == mean.shape == scale.shape
    orig_shape = x.shape
    n = x.size

    # Keep bf16 inputs in bf16 (halves input HBM traffic); everything else f32.
    all_bf16 = all(a.dtype == jnp.bfloat16 for a in (x, mean, scale))
    in_dtype = jnp.bfloat16 if all_bf16 else jnp.float32
    itemsize = 2 if all_bf16 else 4
    row_align = 16 if all_bf16 else 8   # bf16 min tile is (16, 128)

    cols, pad = _choose_layout(n, row_align)
    rows = (n + pad) // cols

    def prep(a, fill):
        a = a.reshape(-1).astype(in_dtype)
        if pad:
            # TODO(synk): rare slow path (n not a multiple of 128) -> one extra
            # HBM pass per input; HiFiC latent shapes are always 128-divisible.
            a = jnp.pad(a, (0, pad), constant_values=fill)
        return a.reshape(rows, cols)

    x2 = prep(x, 0.0)
    m2 = prep(mean, 0.0)
    s2 = prep(scale, 1.0)   # positive fill keeps the padded tail NaN-free

    # Block / grid choice (generation aware).
    ntc = _num_tensorcores()
    target_bytes = (2 if ntc >= 2 else 4) * 1024 * 1024        # per-array block target
    target_rows = max(row_align, (target_bytes // (cols * 4)) // row_align * row_align)

    if ntc >= 2 and rows >= 2 * row_align:
        # v7x: even program count -> balanced TensorCore sharding.
        nblk = max(2, pl.cdiv(rows, target_rows))
        nblk += nblk % 2
        block_rows = min(rows, _round_up(pl.cdiv(rows, nblk), row_align))
    else:
        # Single TC: grid is a serial loop; keep the biggest block that fits.
        block_rows = rows if rows <= target_rows else target_rows
    grid = (pl.cdiv(rows, block_rows),)

    spec = pl.BlockSpec((block_rows, cols), lambda i: (i, 0))

    in_block_bytes = block_rows * cols * itemsize
    out_block_bytes = block_rows * cols * 4
    live_bytes = 2 * (3 * in_block_bytes + out_block_bytes)     # double-buffered
    # Cap well below v7x's 64 MiB physical VMEM (room for Mosaic internal scratch).
    vmem_limit = int(min(48 * 1024 * 1024,
                         max(32 * 1024 * 1024, live_bytes + 8 * 1024 * 1024)))

    n_total = rows * cols
    cost = pl.CostEstimate(
        flops=60 * n_total,                 # 2x erf VPU polynomials dominate
        transcendentals=1 * n_total,        # the reciprocal/divide
        bytes_accessed=(3 * itemsize + 4) * n_total,
    )

    out2 = pl.pallas_call(
        functools.partial(
            _prior_density_kernel,
            min_likelihood=float(min_likelihood),
            scale_lower_bound=(None if scale_lower_bound is None
                               else float(scale_lower_bound)),
        ),
        out_shape=jax.ShapeDtypeStruct((rows, cols), jnp.float32),
        grid_spec=pltpu.PrefetchScalarGridSpec(
            num_scalar_prefetch=0,
            grid=grid,
            in_specs=[spec, spec, spec],
            out_specs=spec,
        ),
        compiler_params=pltpu.CompilerParams(
            dimension_semantics=("parallel",),
            vmem_limit_bytes=vmem_limit,
        ),
        cost_estimate=cost,
    )(x2, m2, s2)

    out = out2.reshape(-1)
    if pad:
        out = out[:n]
    return out.reshape(orig_shape)


def _reference(x, mean, scale, min_likelihood=MIN_LIKELIHOOD):
    xa = jnp.abs(x - mean)
    cdf_u = 0.5 * (1.0 + jax.lax.erf((0.5 - xa) / scale * _INV_SQRT2))
    cdf_l = 0.5 * (1.0 + jax.lax.erf(-(0.5 + xa) / scale * _INV_SQRT2))
    return jnp.maximum(cdf_u - cdf_l, min_likelihood)


if __name__ == "__main__":
    key = jax.random.PRNGKey(0)
    k_x, k_m, k_s = jax.random.split(key, 3)

    B, C, H, W = 2, 4, 16, 16  # n_channels = 4
    x = jax.random.normal(k_x, (B, C, H, W), dtype=jnp.float32) * 2.0
    mean = jax.random.normal(k_m, (B, C, H, W), dtype=jnp.float32)
    # Raw (unclamped) positive scale; the kernel fuses the MIN_SCALE clamp.
    scale_raw = jax.nn.softplus(jax.random.normal(k_s, (B, C, H, W), dtype=jnp.float32))

    out = prior_density_forward(x, mean, scale_raw)
    out = jax.block_until_ready(out)

    ref = _reference(x, mean, jnp.maximum(scale_raw, MIN_SCALE))
    assert out.shape == (B, C, H, W)
    assert out.dtype == jnp.float32
    assert bool(jnp.allclose(out, ref, atol=1e-6, rtol=1e-5)), "mismatch vs reference"

    print("KERNEL_OK")
</pallas_src>

<mosaic_0001>
module attributes {stable_mosaic.version = 11 : i64} {
  func.func @_prior_density_kernel(%arg0: i32, %arg1: memref<8x256xf32, #tpu.memory_space<vmem>>, %arg2: memref<8x256xf32, #tpu.memory_space<vmem>>, %arg3: memref<8x256xf32, #tpu.memory_space<vmem>>, %arg4: memref<8x256xf32, #tpu.memory_space<vmem>>) attributes {dimension_semantics = [#tpu.dimension_semantics<parallel>], iteration_bounds = array<i64: 1>, scalar_prefetch = 0 : i64, scratch_operands = 0 : i64, tpu.core_type = #tpu.core_type<tc>, window_params = [{transform_indices = @transform_0, window_bounds = array<i64: 8, 256>}, {transform_indices = @transform_1, window_bounds = array<i64: 8, 256>}, {transform_indices = @transform_2, window_bounds = array<i64: 8, 256>}, {transform_indices = @transform_3, window_bounds = array<i64: 8, 256>}]} {
    %c0 = arith.constant 0 : index
    %c0_0 = arith.constant 0 : index
    %0 = vector.load %arg1[%c0, %c0_0] : memref<8x256xf32, #tpu.memory_space<vmem>>, vector<8x256xf32>
    %c0_1 = arith.constant 0 : index
    %c0_2 = arith.constant 0 : index
    %1 = vector.load %arg2[%c0_1, %c0_2] : memref<8x256xf32, #tpu.memory_space<vmem>>, vector<8x256xf32>
    %c0_3 = arith.constant 0 : index
    %c0_4 = arith.constant 0 : index
    %2 = vector.load %arg3[%c0_3, %c0_4] : memref<8x256xf32, #tpu.memory_space<vmem>>, vector<8x256xf32>
    %cst = arith.constant 1.100000e-01 : f32
    %3 = vector.broadcast %cst : f32 to vector<8x256xf32>
    %4 = arith.maximumf %2, %3 : vector<8x256xf32>
    %5 = arith.subf %0, %1 : vector<8x256xf32>
    %6 = math.absf %5 : vector<8x256xf32>
    %cst_5 = arith.constant 0.707106769 : f32
    %7 = vector.broadcast %cst_5 : f32 to vector<8x256xf32>
    %8 = arith.divf %7, %4 : vector<8x256xf32>
    %cst_6 = arith.constant 5.000000e-01 : f32
    %9 = vector.broadcast %cst_6 : f32 to vector<8x256xf32>
    %10 = arith.subf %9, %6 : vector<8x256xf32>
    %11 = arith.mulf %10, %8 : vector<8x256xf32>
    %cst_7 = arith.constant 5.000000e-01 : f32
    %12 = vector.broadcast %cst_7 : f32 to vector<8x256xf32>
    %13 = arith.addf %12, %6 : vector<8x256xf32>
    %14 = arith.mulf %13, %8 : vector<8x256xf32>
    %15 = math.erf %11 : vector<8x256xf32>
    %16 = math.erf %14 : vector<8x256xf32>
    %17 = arith.addf %15, %16 : vector<8x256xf32>
    %cst_8 = arith.constant 5.000000e-01 : f32
    %18 = vector.broadcast %cst_8 : f32 to vector<8x256xf32>
    %19 = arith.mulf %18, %17 : vector<8x256xf32>
    %cst_9 = arith.constant 9.99999971E-10 : f32
    %20 = vector.broadcast %cst_9 : f32 to vector<8x256xf32>
    %21 = arith.maximumf %19, %20 : vector<8x256xf32>
    %c0_10 = arith.constant 0 : index
    %c0_11 = arith.constant 0 : index
    %22 = vector.load %arg4[%c0_10, %c0_11] : memref<8x256xf32, #tpu.memory_space<vmem>>, vector<8x256xf32>
    tpu.vector_store %arg4[%c0_10, %c0_11], %21 {strides = array<i32>} : memref<8x256xf32, #tpu.memory_space<vmem>>, vector<8x256xf32>,
    return
  }
  func.func @transform_0(%arg0: i32) -> (i32, i32) {
    %c0_i32 = arith.constant 0 : i32
    %c0_i32_0 = arith.constant 0 : i32
    return %arg0, %c0_i32 : i32, i32
  }
  func.func @transform_1(%arg0: i32) -> (i32, i32) {
    %c0_i32 = arith.constant 0 : i32
    %c0_i32_0 = arith.constant 0 : i32
    return %arg0, %c0_i32 : i32, i32
  }
  func.func @transform_2(%arg0: i32) -> (i32, i32) {
    %c0_i32 = arith.constant 0 : i32
    %c0_i32_0 = arith.constant 0 : i32
    return %arg0, %c0_i32 : i32, i32
  }
  func.func @transform_3(%arg0: i32) -> (i32, i32) {
    %c0_i32 = arith.constant 0 : i32
    %c0_i32_0 = arith.constant 0 : i32
    return %arg0, %c0_i32 : i32, i32
  }
}

</mosaic_0001>

<llo_original>
// kernel: tpu_custom_call.1
$region0: #{tpu_custom_call.1}
  #allocation0 [shape = 'u32[]', space=smem, size = 0x4, offset = 0x4, fixed_abs, tag = 'smem constant byte address 0x4 - core index']
  #allocation1 [shape = 'u32[144,128]{1,0:T(1,128)}', space=vmem, size = 0x12000, scoped, tag = 'internal scratch']
  %s0 = inlined_call_operand.hbm [shape: f32[8,256], index: 0, kind: input, shape index: {}]
  %s1 = inlined_call_operand.hbm [shape: f32[8,256], index: 1, kind: input, shape index: {}]
  %s2 = inlined_call_operand.hbm [shape: f32[8,256], index: 2, kind: input, shape index: {}]
  %s3 = inlined_call_operand.hbm [shape: f32[8,256], index: 3, kind: output, shape index: {}]
  %s4 = sld [smem:[#allocation0]]
  $region34: #{tpu_custom_call.1} parent=0
    _
  %s6 = ssub.s32 1, %s4
  %s7 = scalar_select 0, %s6, %s4
  $region1: #{tpu_custom_call.1} parent=0
    #allocation2 [shape = 'u8[8192]{0}', space=vmem, size = 0x2000, scoped, tag = 'input window, operand 0, single buffered']
    #allocation3 [shape = 's32[1]{0}', space=sflag, size = 0x4, scoped, tag = 'scoped memory for tpu_custom_call.1']
    #allocation4 [shape = 's32[1]{0}', space=sflag, size = 0x4, scoped, tag = 'scoped memory for tpu_custom_call.1']
    #allocation5 [shape = 'u8[8192]{0}', space=vmem, size = 0x2000, scoped, tag = 'input window, operand 1, single buffered']
    #allocation6 [shape = 's32[1]{0}', space=sflag, size = 0x4, scoped, tag = 'scoped memory for tpu_custom_call.1']
    #allocation7 [shape = 'u8[8192]{0}', space=vmem, size = 0x2000, scoped, tag = 'input window, operand 2, single buffered']
    #allocation8 [shape = 'u8[8192]{0}', space=vmem, size = 0x2000, scoped, tag = 'output window, operand 0, single buffered']
    %8 = vsyncpa [#allocation3], 0
    %9 = vsyncpa [#allocation6], 0
    %10 = vsyncpa [#allocation4], 0
    // Predicated region
    $region2: #{tpu_custom_call.1} parent=1 // pred_check
      _
    $region3: #{tpu_custom_call.1} parent=1 // pred_check_branch
      %12 = sbr.rel (0) target = $region5
    $region4: #{tpu_custom_call.1} parent=1 // pred_region
      %s14 = ssub.s32 256, 256
      %15 = vsyncadd [#allocation3], %s14
      %s17 = sshll.u32 [#allocation2], 4
      %s18 = int_to_ptr.vmem [resolvable:$true] %s17
      %20 = dma.hbm_to_vmem [thread:$0]  %s0, 256, %s18, [#allocation3]
    $region5: #{tpu_custom_call.1} parent=1 // pred_fallthru
      _
    // Predicated region
    $region6: #{tpu_custom_call.1} parent=1 // pred_check
      _
    $region7: #{tpu_custom_call.1} parent=1 // pred_check_branch
      %22 = sbr.rel (0) target = $region9
    $region8: #{tpu_custom_call.1} parent=1 // pred_region
      %s24 = ssub.s32 256, 256
      %25 = vsyncadd [#allocation6], %s24
      %s27 = sshll.u32 [#allocation5], 4
      %s28 = int_to_ptr.vmem [resolvable:$true] %s27
      %30 = dma.hbm_to_vmem [thread:$0]  %s1, 256, %s28, [#allocation6]
    $region9: #{tpu_custom_call.1} parent=1 // pred_fallthru
      _
    // Predicated region
    $region10: #{tpu_custom_call.1} parent=1 // pred_check
      _
    $region11: #{tpu_custom_call.1} parent=1 // pred_check_branch
      %32 = sbr.rel (0) target = $region13
    $region12: #{tpu_custom_call.1} parent=1 // pred_region
      %s34 = ssub.s32 256, 256
      %35 = vsyncadd [#allocation6], %s34
      %s37 = sshll.u32 [#allocation7], 4
      %s38 = int_to_ptr.vmem [resolvable:$true] %s37
      %40 = dma.hbm_to_vmem [thread:$0]  %s2, 256, %s38, [#allocation6]
    $region13: #{tpu_custom_call.1} parent=1 // pred_fallthru
      _
    // Predicated region
    $region14: #{tpu_custom_call.1} parent=1 // pred_check
      _
    $region15: #{tpu_custom_call.1} parent=1 // pred_check_branch
      %42 = sbr.rel (0) target = $region17
    $region16: #{tpu_custom_call.1} parent=1 // pred_region
      %43 = dma.done [#allocation3], 256
    $region17: #{tpu_custom_call.1} parent=1 // pred_fallthru
      _
    // Predicated region
    $region18: #{tpu_custom_call.1} parent=1 // pred_check
      _
    $region19: #{tpu_custom_call.1} parent=1 // pred_check_branch
      %45 = sbr.rel (0) target = $region21
    $region20: #{tpu_custom_call.1} parent=1 // pred_region
      %46 = dma.done [#allocation6], 256
    $region21: #{tpu_custom_call.1} parent=1 // pred_fallthru
      _
    // Predicated region
    $region22: #{tpu_custom_call.1} parent=1 // pred_check
      _
    $region23: #{tpu_custom_call.1} parent=1 // pred_check_branch
      %48 = sbr.rel (0) target = $region25
    $region24: #{tpu_custom_call.1} parent=1 // pred_region
      %49 = dma.done [#allocation6], 256
    $region25: #{tpu_custom_call.1} parent=1 // pred_fallthru
      _
    %v50 = vld [vmem:[#allocation2] sm:$0xff]
    %v51 = vld [vmem:[#allocation2 + $0x8] sm:$0xff]
    %v52 = vld [vmem:[#allocation5] sm:$0xff]
    %v53 = vld [vmem:[#allocation5 + $0x8] sm:$0xff]
    %v54 = vld [vmem:[#allocation7] sm:$0xff]
    %v55 = vld [vmem:[#allocation7 + $0x8] sm:$0xff]
    %v56 = vmax.f32 %v54, 0.11
    %v57 = vmax.f32 %v55, 0.11
    %v58 = vsub.f32 %v50, %v52
    %v59 = vsub.f32 %v51, %v53
    %v60 = vand.u32 2147483647, %v58
    %v61 = vand.u32 2147483647, %v59
    %v62 = vrcp.pop %v56
    %v63 = vmul.f32 0.70710677, %v62
    %v64 = vrcp.pop %v57
    %v65 = vmul.f32 0.70710677, %v64
    %v66 = vsub.f32 0.5, %v60
    %v67 = vsub.f32 0.5, %v61
    %v68 = vmul.f32 %v66, %v63
    %v69 = vmul.f32 %v67, %v65
    %v70 = vadd.f32 %v60, 0.5
    %v71 = vadd.f32 %v61, 0.5
    %v72 = vmul.f32 %v70, %v63
    %v73 = vmul.f32 %v71, %v65
    %v74 = verf.f32.pop %v68
    %v75 = verf.f32.pop %v69
    %v76 = verf.f32.pop %v72
    %v77 = verf.f32.pop %v73
    %v78 = vadd.f32 %v74, %v76
    %v79 = vadd.f32 %v75, %v77
    %v80 = vmul.f32 %v78, 0.5
    %v81 = vmul.f32 %v79, 0.5
    %v82 = vmax.f32 %v80, 1e-09
    %v83 = vmax.f32 %v81, 1e-09
    %84 = vst [vmem:[#allocation8] sm:$0xff] %v82
    %85 = vst [vmem:[#allocation8 + $0x8] sm:$0xff] %v83
    // Predicated region
    $region26: #{tpu_custom_call.1} parent=1 // pred_check
      _
    $region27: #{tpu_custom_call.1} parent=1 // pred_check_branch
      %87 = sbr.rel (0) target = $region29
    $region28: #{tpu_custom_call.1} parent=1 // pred_region
      %s89 = ssub.s32 256, 256
      %90 = vsyncadd [#allocation4], %s89
      %s92 = sshll.u32 [#allocation8], 4
      %s93 = int_to_ptr.vmem [resolvable:$true] %s92
      %95 = dma.vmem_to_hbm [thread:$0]  %s93, 256, %s3, [#allocation4]
    $region29: #{tpu_custom_call.1} parent=1 // pred_fallthru
      _
    // Predicated region
    $region30: #{tpu_custom_call.1} parent=1 // pred_check
      _
    $region31: #{tpu_custom_call.1} parent=1 // pred_check_branch
      %97 = sbr.rel (0) target = $region33
    $region32: #{tpu_custom_call.1} parent=1 // pred_region
      %98 = dma.done [#allocation4], 256
    $region33: #{tpu_custom_call.1} parent=1 // pred_fallthru
      _
    %99 = vsyncpa [#allocation3], 1
    %100 = vsyncpa [#allocation6], 1
    %101 = vsyncpa [#allocation4], 1

</llo_original>
